<compile_context>
chip_gen: v5e
topology: v5e:2x2
jax: 0.10.0
libtpu: 0.0.40
codegen_flags: <defaults>
</compile_context>

<pallas_src>
import jax
import jax.numpy as jnp
from jax.experimental import pallas as pl
from jax.experimental.pallas import tpu as pltpu

EPS = 1e-12
POWER_ITERATIONS = 1


def _round_up(x, m):
    return ((x + m - 1) // m) * m


# ---------------- Pallas kernel 1: power iteration -> inv_sigma ---------------
def _power_iter_kernel(w_ref, u_ref, v_ref, inv_sigma_ref, u_out_ref, v_out_ref):
    w = w_ref[...]            # (O, K) f32
    u = u_ref[...]            # (1, O) f32  (lane-dense row vector)
    v = v_ref[...]            # (1, K) f32
    u_norm = None
    for _ in range(POWER_ITERATIONS):
        # v = l2normalize(W^T u)  ==  l2normalize(u_row @ W)        -> (1, K)
        v_raw = jnp.dot(u, w, preferred_element_type=jnp.float32)
        v_norm = jnp.sqrt(jnp.sum(v_raw * v_raw, axis=-1, keepdims=True))   # (1,1)
        v = v_raw * (1.0 / (v_norm + EPS))
        # u = l2normalize(W v)    ==  l2normalize(v_row @ W^T)      -> (1, O)
        u_raw = jax.lax.dot_general(v, w, (((1,), (1,)), ((), ())),
                                    preferred_element_type=jnp.float32)
        u_norm = jnp.sqrt(jnp.sum(u_raw * u_raw, axis=-1, keepdims=True))   # (1,1)
        u = u_raw * (1.0 / (u_norm + EPS))
    # sigma = u . (W v) = u . u_raw = ||u_raw||^2 / (||u_raw|| + EPS)
    # -> reuse the norm instead of recomputing W@v and u.(Wv) on the MXU.
    inv_sigma_ref[...] = (u_norm + EPS) / (u_norm * u_norm)
    u_out_ref[...] = u
    v_out_ref[...] = v


def spectral_norm_power_iteration(w2d, u, v):
    """Returns (inv_sigma (1,1) f32, u_new (O,), v_new (K,))."""
    O, K = w2d.shape
    inv_sigma, u_new, v_new = pl.pallas_call(
        _power_iter_kernel,
        out_shape=(
            jax.ShapeDtypeStruct((1, 1), jnp.float32),
            jax.ShapeDtypeStruct((1, O), jnp.float32),
            jax.ShapeDtypeStruct((1, K), jnp.float32),
        ),
    )(w2d, u.reshape(1, O), v.reshape(1, K))
    return inv_sigma, u_new.reshape(O), v_new.reshape(K)


# ----------- Pallas kernel 2: conv-as-matmul, fused 1/sigma + bias ------------
def _conv_matmul_kernel(w_ref, p_ref, bias_ref, inv_sigma_ref, o_ref):
    # (O, K) bf16 @ (K, tm) bf16 -> (O, tm) f32 accumulate on the MXU.
    acc = jnp.dot(w_ref[...], p_ref[...], preferred_element_type=jnp.float32)
    # Fused spectral-norm scale (SMEM scalar) + bias, all in f32.
    o_ref[...] = acc * inv_sigma_ref[0, 0] + bias_ref[...]


def _choose_tm(HW, N, K, O, vmem_budget=32 * 1024 * 1024):
    """M-tile: multiple of 128, minimal padding waste, VMEM-safe, and (when
    possible) >= 2 total grid tiles so v7x's two TensorCores both get work."""
    HW_pad128 = _round_up(HW, 128)

    def footprint(tm):  # 2x-buffered patches + 2x-buffered f32 out + weight/bias
        return 2 * (K * tm * 2) + 2 * (O * tm * 4) + 2 * (O * K * 2) + 4 * O + 4096

    cands = [c for c in (2048, 1024, 512, 256, 128) if c <= HW_pad128] or [HW_pad128]
    cands = [c for c in cands if footprint(c) <= vmem_budget] or [128]
    tm = min(cands, key=lambda c: (_round_up(HW, c) - HW, -c))
    while N * (_round_up(HW, tm) // tm) < 2 and tm > 128:
        tm //= 2
    return tm, footprint(tm)


def conv2d_spectral_matmul(patches, w2d_bf16, bias, inv_sigma):
    """patches: (N, K, HW) bf16, w2d_bf16: (O, K) bf16 -> (N, O, HW) f32."""
    N, K, HW = patches.shape
    O = w2d_bf16.shape[0]

    tm, footprint = _choose_tm(HW, N, K, O)
    HW_pad = _round_up(HW, tm)
    if HW_pad != HW:
        patches = jnp.pad(patches, ((0, 0), (0, 0), (0, HW_pad - HW)))

    grid = (N, HW_pad // tm)
    bias_col = bias.reshape(O, 1).astype(jnp.float32)

    params = dict(dimension_semantics=("parallel", "parallel"))
    if footprint > 12 * 1024 * 1024:   # above v5e's 16 MiB scoped-VMEM default
        params["vmem_limit_bytes"] = min(int(footprint * 3 // 2), 100 * 1024 * 1024)

    y = pl.pallas_call(
        _conv_matmul_kernel,
        out_shape=jax.ShapeDtypeStruct((N, O, HW_pad), jnp.float32),
        grid=grid,
        in_specs=[
            pl.BlockSpec((O, K), lambda n, i: (0, 0)),        # weight (resident)
            pl.BlockSpec((None, K, tm), lambda n, i: (n, 0, i)),  # patches tile
            pl.BlockSpec((O, 1), lambda n, i: (0, 0)),        # bias (resident)
            pl.BlockSpec(memory_space=pltpu.MemorySpace.SMEM),    # inv_sigma scalar
        ],
        out_specs=pl.BlockSpec((None, O, tm), lambda n, i: (n, 0, i)),
        compiler_params=pltpu.CompilerParams(**params),
    )(w2d_bf16, patches, bias_col, inv_sigma)

    if HW_pad != HW:
        y = y[:, :, :HW]
    return y


# ------------------------------- glue (plain JAX) -----------------------------
def im2col_nkm(x, kh, kw, pad):
    """Patches in (N, K, M) = (N, C*kh*kw, H*W) layout, stride=1, no transpose.

    K ordering matches PyTorch's (C, kh, kw) flattening of the conv weight."""
    N, C, H, W = x.shape
    xp = jnp.pad(x, ((0, 0), (0, 0), (pad, pad), (pad, pad)))
    cols = [xp[:, :, ki:ki + H, kj:kj + W]
            for ki in range(kh) for kj in range(kw)]           # each (N, C, H, W)
    p = jnp.stack(cols, axis=2)                                # (N, C, kh*kw, H, W)
    return p.reshape(N, C * kh * kw, H * W)                    # (N, K, M)


def spectral_norm_conv_forward(x, w_bar, bias, u, v):
    O, C, kh, kw = w_bar.shape
    N, _, H, W = x.shape
    w2d = w_bar.reshape(O, C * kh * kw)

    # Kernel 1: power iteration in f32 -> inv_sigma + updated u/v only.
    inv_sigma, u_new, v_new = spectral_norm_power_iteration(w2d, u, v)

    # Kernel 2: conv-as-matmul; (W/sigma) @ patches == (W @ patches)/sigma, so the
    # spectral-norm scale is fused into the matmul epilogue (no scaled-weight
    # round-trip through HBM). MXU operands in bf16, f32 accumulation/epilogue.
    patches = im2col_nkm(x.astype(jnp.bfloat16), kh, kw, pad=1)   # (N, K, HW)
    y = conv2d_spectral_matmul(patches, w2d.astype(jnp.bfloat16),
                               bias, inv_sigma)                   # (N, O, HW) f32

    return y.reshape(N, O, H, W), u_new, v_new


# ------------------------------ plain-JAX reference ---------------------------
def _l2n(a):
    return a / (jnp.linalg.norm(a) + EPS)


def _reference(x, w_bar, bias, u, v):
    O = w_bar.shape[0]
    w2d = w_bar.reshape(O, -1)
    u_, v_ = u, v
    for _ in range(POWER_ITERATIONS):
        v_ = _l2n(w2d.T @ u_)
        u_ = _l2n(w2d @ v_)
    sigma = u_ @ (w2d @ v_)
    w_sn = w_bar / sigma
    y = jax.lax.conv_general_dilated(
        x, w_sn, window_strides=(1, 1), padding=((1, 1), (1, 1)),
        dimension_numbers=("NCHW", "OIHW", "NCHW"))
    return y + bias.reshape(1, -1, 1, 1), u_, v_


# ------------------------------------ main ------------------------------------
if __name__ == "__main__":
    key = jax.random.PRNGKey(0)
    k1, k2, k3, k4, k5 = jax.random.split(key, 5)

    N, C, H, W = 2, 4, 16, 16       # input [2, 4, 16, 16]
    O, kh, kw = 8, 3, 3             # wrapped Conv2d(4, 8, kernel_size=3, padding=1)
    height, width = O, C * kh * kw  # spectral-norm matrix is (8, 36)

    x = jax.random.normal(k1, (N, C, H, W), jnp.float32)
    w_bar = jax.random.normal(k2, (O, C, kh, kw), jnp.float32) * 0.1
    bias = jax.random.normal(k3, (O,), jnp.float32) * 0.1

    u0 = _l2n(jax.random.normal(k4, (height,), jnp.float32))
    v0 = _l2n(jax.random.normal(k5, (width,), jnp.float32))

    y, u_new, v_new = jax.jit(spectral_norm_conv_forward)(x, w_bar, bias, u0, v0)
    jax.block_until_ready((y, u_new, v_new))
    assert y.shape == (N, O, H, W)

    y_ref, u_ref, v_ref = _reference(x, w_bar, bias, u0, v0)
    assert bool(jnp.allclose(u_new, u_ref, atol=1e-4, rtol=1e-4))
    assert bool(jnp.allclose(v_new, v_ref, atol=1e-4, rtol=1e-4))
    # bf16 MXU operands -> loose tolerance on the conv output.
    assert bool(jnp.allclose(y, y_ref, atol=5e-2, rtol=5e-2))

    print("KERNEL_OK")
</pallas_src>

<mosaic_0001>
module attributes {stable_mosaic.version = 11 : i64} {
  func.func @_power_iter_kernel(%arg0: memref<8x36xf32, #tpu.memory_space<vmem>>, %arg1: memref<1x8xf32, #tpu.memory_space<vmem>>, %arg2: memref<1x36xf32, #tpu.memory_space<vmem>>, %arg3: memref<1x1xf32, #tpu.memory_space<vmem>>, %arg4: memref<1x8xf32, #tpu.memory_space<vmem>>, %arg5: memref<1x36xf32, #tpu.memory_space<vmem>>) attributes {dimension_semantics = [], scalar_prefetch = 0 : i64, scratch_operands = 0 : i64, tpu.core_type = #tpu.core_type<tc>} {
    %c0 = arith.constant 0 : index
    %c0_0 = arith.constant 0 : index
    %0 = vector.load %arg0[%c0, %c0_0] : memref<8x36xf32, #tpu.memory_space<vmem>>, vector<8x36xf32>
    %c0_1 = arith.constant 0 : index
    %c0_2 = arith.constant 0 : index
    %1 = vector.load %arg1[%c0_1, %c0_2] : memref<1x8xf32, #tpu.memory_space<vmem>>, vector<1x8xf32>
    %cst = arith.constant dense<0.000000e+00> : vector<1x36xf32>
    %2 = tpu.matmul %1, %0, %cst {dimension_numbers = #tpu.dot_dimension_numbers<[1], [0], [0], [1], [0, 0, 1, 1], [], []>} : vector<1x8xf32>, vector<8x36xf32>, vector<1x36xf32> -> vector<1x36xf32>
    %3 = arith.mulf %2, %2 : vector<1x36xf32>
    %cst_3 = arith.constant dense<0.000000e+00> : vector<1xf32>
    %4 = vector.multi_reduction <add>, %3, %cst_3 [1] : vector<1x36xf32> to vector<1xf32>
    %5 = vector.shape_cast %4 : vector<1xf32> to vector<1x1xf32>
    %6 = math.sqrt %5 : vector<1x1xf32>
    %cst_4 = arith.constant 9.99999996E-13 : f32
    %7 = vector.broadcast %cst_4 : f32 to vector<1x1xf32>
    %8 = arith.addf %6, %7 : vector<1x1xf32>
    %cst_5 = arith.constant 1.000000e+00 : f32
    %9 = vector.broadcast %cst_5 : f32 to vector<1x1xf32>
    %10 = arith.divf %9, %8 : vector<1x1xf32>
    %11 = vector.broadcast %10 : vector<1x1xf32> to vector<1x36xf32>
    %12 = arith.mulf %2, %11 : vector<1x36xf32>
    %cst_6 = arith.constant dense<0.000000e+00> : vector<1x8xf32>
    %13 = tpu.matmul %12, %0, %cst_6 {dimension_numbers = #tpu.dot_dimension_numbers<[1], [1], [0], [0], [0, 0, 1, 0], [], []>} : vector<1x36xf32>, vector<8x36xf32>, vector<1x8xf32> -> vector<1x8xf32>
    %14 = arith.mulf %13, %13 : vector<1x8xf32>
    %cst_7 = arith.constant dense<0.000000e+00> : vector<1xf32>
    %15 = vector.multi_reduction <add>, %14, %cst_7 [1] : vector<1x8xf32> to vector<1xf32>
    %16 = vector.shape_cast %15 : vector<1xf32> to vector<1x1xf32>
    %17 = math.sqrt %16 : vector<1x1xf32>
    %cst_8 = arith.constant 9.99999996E-13 : f32
    %18 = vector.broadcast %cst_8 : f32 to vector<1x1xf32>
    %19 = arith.addf %17, %18 : vector<1x1xf32>
    %cst_9 = arith.constant 1.000000e+00 : f32
    %20 = vector.broadcast %cst_9 : f32 to vector<1x1xf32>
    %21 = arith.divf %20, %19 : vector<1x1xf32>
    %22 = vector.broadcast %21 : vector<1x1xf32> to vector<1x8xf32>
    %23 = arith.mulf %13, %22 : vector<1x8xf32>
    %cst_10 = arith.constant 9.99999996E-13 : f32
    %24 = vector.broadcast %cst_10 : f32 to vector<1x1xf32>
    %25 = arith.addf %17, %24 : vector<1x1xf32>
    %26 = arith.mulf %17, %17 : vector<1x1xf32>
    %27 = arith.divf %25, %26 : vector<1x1xf32>
    %c0_11 = arith.constant 0 : index
    %c0_12 = arith.constant 0 : index
    %28 = vector.load %arg3[%c0_11, %c0_12] : memref<1x1xf32, #tpu.memory_space<vmem>>, vector<1x1xf32>
    tpu.vector_store %arg3[%c0_11, %c0_12], %27 {strides = array<i32>} : memref<1x1xf32, #tpu.memory_space<vmem>>, vector<1x1xf32>,
    %c0_13 = arith.constant 0 : index
    %c0_14 = arith.constant 0 : index
    %29 = vector.load %arg4[%c0_13, %c0_14] : memref<1x8xf32, #tpu.memory_space<vmem>>, vector<1x8xf32>
    tpu.vector_store %arg4[%c0_13, %c0_14], %23 {strides = array<i32>} : memref<1x8xf32, #tpu.memory_space<vmem>>, vector<1x8xf32>,
    %c0_15 = arith.constant 0 : index
    %c0_16 = arith.constant 0 : index
    %30 = vector.load %arg5[%c0_15, %c0_16] : memref<1x36xf32, #tpu.memory_space<vmem>>, vector<1x36xf32>
    tpu.vector_store %arg5[%c0_15, %c0_16], %12 {strides = array<i32>} : memref<1x36xf32, #tpu.memory_space<vmem>>, vector<1x36xf32>,
    return
  }
}

module attributes {stable_mosaic.version = 11 : i64} {
  func.func @_conv_matmul_kernel(%arg0: i32, %arg1: i32, %arg2: memref<8x36xbf16, #tpu.memory_space<vmem>>, %arg3: memref<1x36x256xbf16, #tpu.memory_space<vmem>>, %arg4: memref<8x1xf32, #tpu.memory_space<vmem>>, %arg5: memref<1x1xf32, #tpu.memory_space<smem>>, %arg6: memref<1x8x256xf32, #tpu.memory_space<vmem>>) attributes {dimension_semantics = [#tpu.dimension_semantics<parallel>, #tpu.dimension_semantics<parallel>], iteration_bounds = array<i64: 2, 1>, scalar_prefetch = 0 : i64, scratch_operands = 0 : i64, tpu.core_type = #tpu.core_type<tc>, window_params = [{pipeline_mode = #tpu.pipeline_mode<synchronous>, transform_indices = @transform_0, window_bounds = array<i64: 8, 36>}, {transform_indices = @transform_1, window_bounds = array<i64: 1, 36, 256>}, {pipeline_mode = #tpu.pipeline_mode<synchronous>, transform_indices = @transform_2, window_bounds = array<i64: 8, 1>}, {transform_indices = @transform_3, window_bounds = array<i64: 1, 1>}, {transform_indices = @transform_4, window_bounds = array<i64: 1, 8, 256>}]} {
    %c0 = arith.constant 0 : index
    %c0_0 = arith.constant 0 : index
    %0 = vector.load %arg2[%c0, %c0_0] : memref<8x36xbf16, #tpu.memory_space<vmem>>, vector<8x36xbf16>
    %c0_1 = arith.constant 0 : index
    %c0_2 = arith.constant 0 : index
    %c0_3 = arith.constant 0 : index
    %1 = vector.load %arg3[%c0_1, %c0_2, %c0_3] : memref<1x36x256xbf16, #tpu.memory_space<vmem>>, vector<1x36x256xbf16>
    %2 = vector.shape_cast %1 : vector<1x36x256xbf16> to vector<36x256xbf16>
    %cst = arith.constant dense<0.000000e+00> : vector<8x256xf32>
    %3 = tpu.matmul %0, %2, %cst {dimension_numbers = #tpu.dot_dimension_numbers<[1], [0], [0], [1], [0, 0, 1, 1], [], []>} : vector<8x36xbf16>, vector<36x256xbf16>, vector<8x256xf32> -> vector<8x256xf32>
    %c0_4 = arith.constant 0 : index
    %c0_5 = arith.constant 0 : index
    %4 = memref.load %arg5[%c0_4, %c0_5] : memref<1x1xf32, #tpu.memory_space<smem>>
    %5 = vector.broadcast %4 : f32 to vector<8x256xf32>
    %6 = arith.mulf %3, %5 : vector<8x256xf32>
    %c0_6 = arith.constant 0 : index
    %c0_7 = arith.constant 0 : index
    %7 = vector.load %arg4[%c0_6, %c0_7] : memref<8x1xf32, #tpu.memory_space<vmem>>, vector<8x1xf32>
    %8 = vector.broadcast %7 : vector<8x1xf32> to vector<8x256xf32>
    %9 = arith.addf %6, %8 : vector<8x256xf32>
    %c0_8 = arith.constant 0 : index
    %c0_9 = arith.constant 0 : index
    %c0_10 = arith.constant 0 : index
    %10 = vector.load %arg6[%c0_8, %c0_9, %c0_10] : memref<1x8x256xf32, #tpu.memory_space<vmem>>, vector<1x8x256xf32>
    %11 = vector.shape_cast %10 : vector<1x8x256xf32> to vector<8x256xf32>
    %12 = vector.shape_cast %9 : vector<8x256xf32> to vector<1x8x256xf32>
    tpu.vector_store %arg6[%c0_8, %c0_9, %c0_10], %12 {strides = array<i32>} : memref<1x8x256xf32, #tpu.memory_space<vmem>>, vector<1x8x256xf32>,
    return
  }
  func.func @transform_0(%arg0: i32, %arg1: i32) -> (i32, i32) {
    %c0_i32 = arith.constant 0 : i32
    %c0_i32_0 = arith.constant 0 : i32
    %c0_i32_1 = arith.constant 0 : i32
    return %c0_i32, %c0_i32_0 : i32, i32
  }
  func.func @transform_1(%arg0: i32, %arg1: i32) -> (i32, i32, i32) {
    %c0_i32 = arith.constant 0 : i32
    %c0_i32_0 = arith.constant 0 : i32
    return %arg0, %c0_i32, %arg1 : i32, i32, i32
  }
  func.func @transform_2(%arg0: i32, %arg1: i32) -> (i32, i32) {
    %c0_i32 = arith.constant 0 : i32
    %c0_i32_0 = arith.constant 0 : i32
    %c0_i32_1 = arith.constant 0 : i32
    return %c0_i32, %c0_i32_0 : i32, i32
  }
  func.func @transform_3(%arg0: i32, %arg1: i32) -> (i32, i32) {
    %c0_i32 = arith.constant 0 : i32
    %c0_i32_0 = arith.constant 0 : i32
    %c0_i32_1 = arith.constant 0 : i32
    return %c0_i32, %c0_i32_0 : i32, i32
  }
  func.func @transform_4(%arg0: i32, %arg1: i32) -> (i32, i32, i32) {
    %c0_i32 = arith.constant 0 : i32
    %c0_i32_0 = arith.constant 0 : i32
    return %arg0, %c0_i32, %arg1 : i32, i32, i32
  }
}

</mosaic_0001>

<llo_original>
// kernel: spectral_norm_conv_forward.3
$region0: #{spectral_norm_conv_forward.3}
  #allocation0 [shape = 'u32[]', space=smem, size = 0x4, offset = 0x4, fixed_abs, tag = 'smem constant byte address 0x4 - core index']
  #allocation1 [shape = 'u32[72,128]{1,0:T(1,128)}', space=vmem, size = 0x9000, scoped, tag = 'internal scratch']
  #allocation2 [shape = 'f32[1,1]{1,0:T(1,128)S(6)}', space=smem, size = 0x200, scoped, tag = 'scoped memory for spectral_norm_conv_forward.3']
  %s0 = inlined_call_operand.vmem [shape: bf16[8,36], index: 0, kind: input, shape index: {}]
  %s1 = inlined_call_operand.vmem [shape: bf16[2,36,256], index: 1, kind: input, shape index: {}]
  %s2 = inlined_call_operand.vmem [shape: f32[8,1], index: 2, kind: input, shape index: {}]
  %s3 = inlined_call_operand.<no memory space> [shape: f32[1,1], index: 3, kind: input, shape index: {}]
  %s4 = inlined_call_operand.vmem [shape: f32[2,8,256], index: 4, kind: output, shape index: {}]
  %s5 = sld [smem:[#allocation0]]
  $region49: #{spectral_norm_conv_forward.3} parent=0
    _
  %s7 = ssub.s32 1, %s5
  %s8 = scalar_select 0, %s7, %s5
  %9 = sst [smem:[#allocation2]] %s3
  loop: start=0, step=1, limit=4
  $region2: #{spectral_norm_conv_forward.3} parent=0 // loop_pre_header
    _
  $region3: #{spectral_norm_conv_forward.3} parent=0 // loop_header
    %s11 = sphi 0, %s15
    %p12 = scmp.ge.s32.totalorder %s11, 4
    %s18 = sphi 0, %s30
    %s19 = sphi 0, %s26
    %s20 = sphi 0, %s18
    %s21 = sphi 0, %s19
    %s22 = sphi 0, %s20
    %s23 = sphi 0, %s21
    %s31 = sphi 0, %s31
    %s33 = sphi 0, %s31
    %s34 = sphi 0, %s33
    %s48 = sphi 0, %s34
    %s56 = sphi 0, %s58
    %s59 = sphi 0, %s56
    %s60 = sphi 0, %s59
    %s76 = sphi 0, %s60
    %s80 = sphi 0, %s80
    %s82 = sphi 0, %s80
    %s83 = sphi 0, %s82
    %s97 = sphi 0, %s83
    %s101 = sphi 0, %s101
    %s103 = sphi 0, %s101
    %s104 = sphi 0, %s103
    %s118 = sphi 0, %s104
    %s126 = sphi 0, %s128
    %s129 = sphi 0, %s126
    %s130 = sphi 0, %s129
    %s146 = sphi 0, %s130
  $region4: #{spectral_norm_conv_forward.3} parent=0 // loop_header_branch
    %14 = sbr.rel (%p12) target = $region8
  $region5: #{spectral_norm_conv_forward.3} parent=0 // loop_body
    %s16 = ssub.s32 %s11, 1
    %s17 = ssub.s32 %s11, 2
    %s24 = sadd.s32 1, %s19
    %p25 = scmp.ge.s32.totalorder %s24, 1
    %s26 = scalar_select %p25, 0, %s24
    %s27 = sadd.s32 1, %s18
    %s28 = scalar_select %p25, %s27, %s18
    %p29 = scmp.ge.s32.totalorder %s28, 2
    %s30 = scalar_select %p29, 0, %s28
    %s32 = sadd.s32 %s31, 1
    %p35 = scmp.eq.s32.totalorder %s11, 1
    %p36 = scmp.ne.s32.totalorder %s31, %s33
    %p37 = scmp.eq.s32.totalorder %s11, 0
    %p38 = por %p36, %p37
    %p39 = scmp.ne.s32.totalorder %s31, %s33
    %p40 = scmp.eq.s32.totalorder %s16, 1
    %p41 = por %p39, %p40
    %p42 = scmp.ne.s32.totalorder %s33, %s34
    %p43 = scmp.eq.s32.totalorder %s16, 0
    %p44 = por %p42, %p43
    %p45 = scmp.ne.s32.totalorder %s33, %s34
    %p46 = scmp.eq.s32.totalorder %s17, 1
    %p47 = por %p45, %p46
    %p49 = scmp.ne.s32.totalorder %s34, %s48
    %p50 = scmp.eq.s32.totalorder %s17, 0
    %p51 = por %p49, %p50
    %s52 = ssub.s32 %s18, %s30
    %s53 = ssub.s32 %s19, %s26
    %s54 = sor.u32 %s52, %s53
    %p55 = scmp.eq.s32.totalorder %s54, 0
    %s57 = sadd.s32 %s56, 1
    %s58 = scalar_select %p55, %s56, %s57
    %p61 = pneg %p55
    %p62 = scmp.eq.s32.totalorder %s11, 1
    %p63 = por %p61, %p62
    %p64 = scmp.ne.s32.totalorder %s56, %s59
    %p65 = scmp.eq.s32.totalorder %s11, 0
    %p66 = por %p64, %p65
    %p67 = scmp.ne.s32.totalorder %s56, %s59
    %p68 = scmp.eq.s32.totalorder %s16, 1
    %p69 = por %p67, %p68
    %p70 = scmp.ne.s32.totalorder %s59, %s60
    %p71 = scmp.eq.s32.totalorder %s16, 0
    %p72 = por %p70, %p71
    %p73 = scmp.ne.s32.totalorder %s59, %s60
    %p74 = scmp.eq.s32.totalorder %s17, 1
    %p75 = por %p73, %p74
    %p77 = scmp.ne.s32.totalorder %s60, %s76
    %p78 = scmp.eq.s32.totalorder %s17, 0
    %p79 = por %p77, %p78
    %s81 = sadd.s32 %s80, 1
    %p84 = scmp.eq.s32.totalorder %s11, 1
    %p85 = scmp.ne.s32.totalorder %s80, %s82
    %p86 = scmp.eq.s32.totalorder %s11, 0
    %p87 = por %p85, %p86
    %p88 = scmp.ne.s32.totalorder %s80, %s82
    %p89 = scmp.eq.s32.totalorder %s16, 1
    %p90 = por %p88, %p89
    %p91 = scmp.ne.s32.totalorder %s82, %s83
    %p92 = scmp.eq.s32.totalorder %s16, 0
    %p93 = por %p91, %p92
    %p94 = scmp.ne.s32.totalorder %s82, %s83
    %p95 = scmp.eq.s32.totalorder %s17, 1
    %p96 = por %p94, %p95
    %p98 = scmp.ne.s32.totalorder %s83, %s97
    %p99 = scmp.eq.s32.totalorder %s17, 0
    %p100 = por %p98, %p99
    %s102 = sadd.s32 %s101, 1
    %p105 = scmp.eq.s32.totalorder %s11, 1
    %p106 = scmp.ne.s32.totalorder %s101, %s103
    %p107 = scmp.eq.s32.totalorder %s11, 0
    %p108 = por %p106, %p107
    %p109 = scmp.ne.s32.totalorder %s101, %s103
    %p110 = scmp.eq.s32.totalorder %s16, 1
    %p111 = por %p109, %p110
    %p112 = scmp.ne.s32.totalorder %s103, %s104
    %p113 = scmp.eq.s32.totalorder %s16, 0
    %p114 = por %p112, %p113
    %p115 = scmp.ne.s32.totalorder %s103, %s104
    %p116 = scmp.eq.s32.totalorder %s17, 1
    %p117 = por %p115, %p116
    %p119 = scmp.ne.s32.totalorder %s104, %s118
    %p120 = scmp.eq.s32.totalorder %s17, 0
    %p121 = por %p119, %p120
    %s122 = ssub.s32 %s18, %s30
    %s123 = ssub.s32 %s19, %s26
    %s124 = sor.u32 %s122, %s123
    %p125 = scmp.eq.s32.totalorder %s124, 0
    %s127 = sadd.s32 %s126, 1
    %s128 = scalar_select %p125, %s126, %s127
    %p131 = pneg %p125
    %p132 = scmp.eq.s32.totalorder %s11, 1
    %p133 = por %p131, %p132
    %p134 = scmp.ne.s32.totalorder %s126, %s129
    %p135 = scmp.eq.s32.totalorder %s11, 0
    %p136 = por %p134, %p135
    %p137 = scmp.ne.s32.totalorder %s126, %s129
    %p138 = scmp.eq.s32.totalorder %s16, 1
    %p139 = por %p137, %p138
    %p140 = scmp.ne.s32.totalorder %s129, %s130
    %p141 = scmp.eq.s32.totalorder %s16, 0
    %p142 = por %p140, %p141
    %p143 = scmp.ne.s32.totalorder %s129, %s130
    %p144 = scmp.eq.s32.totalorder %s17, 1
    %p145 = por %p143, %p144
    %p147 = scmp.ne.s32.totalorder %s130, %s146
    %p148 = scmp.eq.s32.totalorder %s17, 0
    %p149 = por %p147, %p148
    %p150 = scmp.le.s32.totalorder 1, %s11
    %p151 = scmp.lt.s32.totalorder %s11, 3
    %p152 = pnand %p150, %p151
    %p153 = pneg %p152
    // Predicated region
    $region9: #{spectral_norm_conv_forward.3} parent=5 // pred_check
      _
    $region10: #{spectral_norm_conv_forward.3} parent=5 // pred_check_branch
      %155 = sbr.rel (%p152) target = $region12
    $region11: #{spectral_norm_conv_forward.3} parent=5 // pred_region
      %s156 = ssub.s32 %s11, 1
      // Predicated region
      $region13: #{spectral_norm_conv_forward.3} parent=11 // pred_check
        %p157 = pneg %p44
      $region14: #{spectral_norm_conv_forward.3} parent=11 // pred_check_branch
        %159 = sbr.rel (%p157) target = $region16
      $region15: #{spectral_norm_conv_forward.3} parent=11 // pred_region
        _
      $region16: #{spectral_norm_conv_forward.3} parent=11 // pred_fallthru
        _
      // Predicated region
      $region17: #{spectral_norm_conv_forward.3} parent=11 // pred_check
        %p160 = pneg %p93
      $region18: #{spectral_norm_conv_forward.3} parent=11 // pred_check_branch
        %162 = sbr.rel (%p160) target = $region20
      $region19: #{spectral_norm_conv_forward.3} parent=11 // pred_region
        _
      $region20: #{spectral_norm_conv_forward.3} parent=11 // pred_fallthru
        _
      // Predicated region
      $region21: #{spectral_norm_conv_forward.3} parent=11 // pred_check
        %p163 = pneg %p114
      $region22: #{spectral_norm_conv_forward.3} parent=11 // pred_check_branch
        %165 = sbr.rel (%p163) target = $region24
      $region23: #{spectral_norm_conv_forward.3} parent=11 // pred_region
        _
      $region24: #{spectral_norm_conv_forward.3} parent=11 // pred_fallthru
        _
    $region12: #{spectral_norm_conv_forward.3} parent=5 // pred_fallthru
      _
    %p166 = scmp.lt.s32.totalorder %s11, 2
    // Predicated region
    $region25: #{spectral_norm_conv_forward.3} parent=5 // pred_check
      %p167 = pneg %p166
    $region26: #{spectral_norm_conv_forward.3} parent=5 // pred_check_branch
      %169 = sbr.rel (%p167) target = $region28
    $region27: #{spectral_norm_conv_forward.3} parent=5 // pred_region
      // Predicated region
      $region29: #{spectral_norm_conv_forward.3} parent=27 // pred_check
        %p170 = pneg %p66
      $region30: #{spectral_norm_conv_forward.3} parent=27 // pred_check_branch
        %172 = sbr.rel (%p170) target = $region32
      $region31: #{spectral_norm_conv_forward.3} parent=27 // pred_region
        %s173 = smul.u32 2, %s19
        %p174 = scmp.lt.s32.totalorder %s18, 1
        %s175 = scalar_select %p174, %s18, 1
        %p176 = scmp.lt.s32.totalorder %s173, 1
        %s177 = scalar_select %p176, %s173, 1
        %s178 = smul.addr %s175, 10
        %s179 = sadd.s32 %s177, %s178
        %s180 = smul.addr %s179, 4
        %s181 = scalar_lea.vmem %s1, %s180
        %s182 = smul.u32 2, %s19
      $region32: #{spectral_norm_conv_forward.3} parent=27 // pred_fallthru
        _
    $region28: #{spectral_norm_conv_forward.3} parent=5 // pred_fallthru
      _
    %p183 = scmp.le.s32.totalorder 1, %s11
    %p184 = scmp.lt.s32.totalorder %s11, 3
    %p185 = pnand %p183, %p184
    %p186 = pneg %p185
    // Predicated region
    $region33: #{spectral_norm_conv_forward.3} parent=5 // pred_check
      _
    $region34: #{spectral_norm_conv_forward.3} parent=5 // pred_check_branch
      %188 = sbr.rel (%p185) target = $region36
    $region35: #{spectral_norm_conv_forward.3} parent=5 // pred_region
      %s189 = ssub.s32 %s11, 1
      %p190 = pneg %p44
      %p191 = pneg %p41
      %s192 = smul.u32 2, %s21
      %p193 = scmp.lt.s32.totalorder %s20, 1
      %s194 = scalar_select %p193, %s20, 1
      %p195 = scmp.lt.s32.totalorder %s192, 1
      %s196 = scalar_select %p195, %s192, 1
      %s197 = smul.addr %s194, 10
      %s198 = sadd.s32 %s196, %s197
      %s199 = smul.addr %s198, 4
      %s200 = scalar_lea.vmem %s1, %s199
      %p201 = pneg %p72
      %p202 = pneg %p69
      %p203 = pneg %p93
      %p204 = pneg %p90
      %p205 = pneg %p114
      %p206 = pneg %p111
      %p207 = pneg %p142
      %p208 = pneg %p139
      %s209 = smul.u32 2, %s21
      %p210 = scmp.lt.s32.totalorder %s20, 1
      %s211 = scalar_select %p210, %s20, 1
      %p212 = scmp.lt.s32.totalorder %s209, 1
      %s213 = scalar_select %p212, %s209, 1
      %s214 = smul.addr %s211, 2
      %s215 = sadd.s32 %s213, %s214
      %s216 = smul.addr %s215, 8
      %s217 = scalar_lea.vmem %s4, %s216
      %s218 = smul.u32 2, %s21
      %p219 = scmp.lt.s32.totalorder %s20, 1
      %s220 = scalar_select %p219, %s20, 1
      %p221 = scmp.lt.s32.totalorder %s218, 1
      %s222 = scalar_select %p221, %s218, 1
      %s223 = smul.addr %s220, 10
      %s224 = sadd.s32 %s222, %s223
      %s225 = smul.addr %s224, 4
      %s226 = scalar_lea.vmem %s1, %s225
      %s227 = smul.u32 2, %s21
      %s228 = smul.u32 2, %s21
      %p229 = scmp.lt.s32.totalorder %s20, 1
      %s230 = scalar_select %p229, %s20, 1
      %p231 = scmp.lt.s32.totalorder %s228, 1
      %s232 = scalar_select %p231, %s228, 1
      %s233 = smul.addr %s230, 2
      %s234 = sadd.s32 %s232, %s233
      %s235 = smul.addr %s234, 8
      %s236 = scalar_lea.vmem %s4, %s235
      %s237 = smul.u32 2, %s21
      %v239 = vld [vmem:[%s0] sm:$0xf]
      %v240 = vld [vmem:[%s226] sm:$0xff]
      %v241 = vld [vmem:[%s226 + $0x8] sm:$0xff]
      %v242 = vld [vmem:[%s226 + $0x10] sm:$0xff]
      %v243 = vld [vmem:[%s226 + $0x18] sm:$0xff]
      %v244 = vld [vmem:[%s226 + $0x20] sm:$0x33]
      %v250 = vunpack.c.l.b16 %v240
      %v251 = vunpack.c.h.b16 %v240
      %v252 = vunpack.c.l.b16 %v241
      %v253 = vunpack.c.h.b16 %v241
      %v254 = vunpack.c.l.b16 %v242
      %v255 = vunpack.c.h.b16 %v242
      %v256 = vunpack.c.l.b16 %v243
      %v257 = vunpack.c.h.b16 %v243
      %v258 = vunpack.c.l.b16 %v244
      %v259 = vunpack.c.h.b16 %v244
      %v260 = vpack.c.b16 %v252, %v250
      %v261 = vpack.c.b16 %v253, %v251
      %v262 = vpack.c.b16 %v256, %v254
      %v263 = vpack.c.b16 %v257, %v255
      %v264 = vpack.c.b16 %v258, %v258
      %v265 = vpack.c.b16 %v259, %v259
      %vm270 = vcmask 293888
      %v272 = vsel %vm270, %v239, 0
      %vm274 = vcmask 1041408
      %v276 = vsel %vm274, %v264, 0
      %v279 = vsel %vm274, %v265, 0
      %281 = vmatpush.bf16.msra.mxu0 0
      %282 = vmatpush.bf16.msra.mxu0 0
      %283 = vmatpush.bf16.msra.mxu0 0
      %284 = vmatpush.bf16.msra.mxu0 0
      %285 = vmatpush.bf16.msra.mxu0 0
      %286 = vmatpush.bf16.msra.mxu0 %v276
      %287 = vmatpush.bf16.msra.mxu0 %v262
      %288 = vmatpush.bf16.msra.mxu0 %v260
      %289 = vmatmul.bf16.gmra.mxu0 %v272
      %v290 = vpop.f32.mrf.mxu0
      %v291 = vadd.f32 0.0, %v290
      %v292 = vpop.f32.mrf.mxu0
      %293 = vdwg.mxu0
      %294 = vmatpush.bf16.msra.mxu0 0
      %295 = vmatpush.bf16.msra.mxu0 0
      %296 = vmatpush.bf16.msra.mxu0 0
      %297 = vmatpush.bf16.msra.mxu0 0
      %298 = vmatpush.bf16.msra.mxu0 0
      %299 = vmatpush.bf16.msra.mxu0 %v279
      %300 = vmatpush.bf16.msra.mxu0 %v263
      %301 = vmatpush.bf16.msra.mxu0 %v261
      %302 = vmatmul.bf16.gmra.mxu0 %v272
      %v303 = vpop.f32.mrf.mxu0
      %v304 = vadd.f32 0.0, %v303
      %v305 = vpop.f32.mrf.mxu0
      %306 = vdwg.mxu0
      %s307 = sld [smem:[#allocation2]]
      %v308 = vstv %s307
      %v309 = vmul.f32 %v291, %v308
      %v310 = vmul.f32 %v304, %v308
      %v311 = vld [vmem:[%s2] sm:$0xff]
      %313 = vset.pattern.permute.xlu0 0
      %314 = vperm.xlu0 %313, %v311
      %v315 = vpop.permute.xlu0 %314
      %v317 = vadd.f32 %v309, %v315
      %v318 = vadd.f32 %v310, %v315
      %319 = vst [vmem:[%s236] sm:$0xff] %v317
      %320 = vst [vmem:[%s236 + $0x8] sm:$0xff] %v318
      %s321 = smul.u32 2, %s21
      %p322 = scmp.lt.s32.totalorder %s20, 1
      %s323 = scalar_select %p322, %s20, 1
      %p324 = scmp.lt.s32.totalorder %s321, 1
      %s325 = scalar_select %p324, %s321, 1
      %s326 = smul.addr %s323, 2
      %s327 = sadd.s32 %s325, %s326
      %s328 = smul.addr %s327, 8
      %s329 = scalar_lea.vmem %s4, %s328
      // Predicated region
      $region37: #{spectral_norm_conv_forward.3} parent=35 // pred_check
        %p330 = pneg %p139
      $region38: #{spectral_norm_conv_forward.3} parent=35 // pred_check_branch
        %332 = sbr.rel (%p330) target = $region40
      $region39: #{spectral_norm_conv_forward.3} parent=35 // pred_region
        %s333 = smul.u32 2, %s21
      $region40: #{spectral_norm_conv_forward.3} parent=35 // pred_fallthru
        _
    $region36: #{spectral_norm_conv_forward.3} parent=5 // pred_fallthru
      _
    %p334 = scmp.le.s32.totalorder 2, %s11
    // Predicated region
    $region41: #{spectral_norm_conv_forward.3} parent=5 // pred_check
      %p335 = pneg %p334
    $region42: #{spectral_norm_conv_forward.3} parent=5 // pred_check_branch
      %337 = sbr.rel (%p335) target = $region44
    $region43: #{spectral_norm_conv_forward.3} parent=5 // pred_region
      %s338 = ssub.s32 %s11, 2
      // Predicated region
      $region45: #{spectral_norm_conv_forward.3} parent=43 // pred_check
        %p339 = pneg %p145
      $region46: #{spectral_norm_conv_forward.3} parent=43 // pred_check_branch
        %341 = sbr.rel (%p339) target = $region48
      $region47: #{spectral_norm_conv_forward.3} parent=43 // pred_region
        %s342 = smul.u32 2, %s23
        %p343 = scmp.lt.s32.totalorder %s22, 1
        %s344 = scalar_select %p343, %s22, 1
        %p345 = scmp.lt.s32.totalorder %s342, 1
        %s346 = scalar_select %p345, %s342, 1
        %s347 = smul.addr %s344, 2
        %s348 = sadd.s32 %s346, %s347
        %s349 = smul.addr %s348, 8
        %s350 = scalar_lea.vmem %s4, %s349
      $region48: #{spectral_norm_conv_forward.3} parent=43 // pred_fallthru
        _
    $region44: #{spectral_norm_conv_forward.3} parent=5 // pred_fallthru
      _
  $region6: #{spectral_norm_conv_forward.3} parent=0 // loop_footer
    %s15 = sadd.s32 1, %s11
  $region7: #{spectral_norm_conv_forward.3} parent=0 // loop_footer_branch
    %10 = sbr.rel target = $region3
  $region8: #{spectral_norm_conv_forward.3} parent=0 // loop_exit
    _

// kernel: spectral_norm_conv_forward.2
$region0: #{spectral_norm_conv_forward.2}
  #allocation0 [shape = 'u32[]', space=smem, size = 0x4, offset = 0x4, fixed_abs, tag = 'smem constant byte address 0x4 - core index']
  #allocation1 [shape = 'u32[72,128]{1,0:T(1,128)}', space=vmem, size = 0x9000, scoped, tag = 'internal scratch']
  %s0 = inlined_call_operand.vmem [shape: f32[8,36], index: 0, kind: input, shape index: {}]
  %s1 = inlined_call_operand.vmem [shape: f32[1,8], index: 1, kind: input, shape index: {}]
  %s2 = inlined_call_operand.vmem [shape: f32[1,36], index: 2, kind: input, shape index: {}]
  %s3 = inlined_call_operand.hbm [shape: f32[1,1], index: 3, kind: output, shape index: {0}]
  %s4 = inlined_call_operand.hbm [shape: f32[1,8], index: 4, kind: output, shape index: {1}]
  %s5 = inlined_call_operand.hbm [shape: f32[1,36], index: 5, kind: output, shape index: {2}]
  %6 = xla_tuple %s3, %s4, %s5
  %s7 = sld [smem:[#allocation0]]
  $region38: #{spectral_norm_conv_forward.2} parent=0
    _
  %s9 = ssub.s32 1, %s7
  %s10 = scalar_select 0, %s9, %s7
  $region1: #{spectral_norm_conv_forward.2} parent=0
    #allocation2 [shape = 'u8[512]{0}', space=vmem, size = 0x400, scoped, tag = 'output window, operand 0, single buffered']
    #allocation3 [shape = 's32[1]{0}', space=sflag, size = 0x4, scoped, tag = 'scoped memory for spectral_norm_conv_forward.2']
    #allocation4 [shape = 'u8[512]{0}', space=vmem, size = 0x400, scoped, tag = 'output window, operand 1, single buffered']
    #allocation5 [shape = 's32[1]{0}', space=sflag, size = 0x4, scoped, tag = 'scoped memory for spectral_norm_conv_forward.2']
    #allocation6 [shape = 'u8[512]{0}', space=vmem, size = 0x400, scoped, tag = 'output window, operand 2, single buffered']
    %11 = vsyncpa [#allocation3], 0
    %12 = vsyncpa [#allocation5], 0
    // Predicated region
    $region2: #{spectral_norm_conv_forward.2} parent=1 // pred_check
      _
    $region3: #{spectral_norm_conv_forward.2} parent=1 // pred_check_branch
      %14 = sbr.rel (0) target = $region5
    $region4: #{spectral_norm_conv_forward.2} parent=1 // pred_region
      _
    $region5: #{spectral_norm_conv_forward.2} parent=1 // pred_fallthru
      _
    // Predicated region
    $region6: #{spectral_norm_conv_forward.2} parent=1 // pred_check
      _
    $region7: #{spectral_norm_conv_forward.2} parent=1 // pred_check_branch
      %16 = sbr.rel (0) target = $region9
    $region8: #{spectral_norm_conv_forward.2} parent=1 // pred_region
      _
    $region9: #{spectral_norm_conv_forward.2} parent=1 // pred_fallthru
      _
    // Predicated region
    $region10: #{spectral_norm_conv_forward.2} parent=1 // pred_check
      _
    $region11: #{spectral_norm_conv_forward.2} parent=1 // pred_check_branch
      %18 = sbr.rel (0) target = $region13
    $region12: #{spectral_norm_conv_forward.2} parent=1 // pred_region
      _
    $region13: #{spectral_norm_conv_forward.2} parent=1 // pred_fallthru
      _
    %v19 = vld [vmem:[%s0] sm:$0xff]
    %v20 = vld [vmem:[%s1] sm:$0x1]
    %vm21 = vcmask 64512
    %v23 = vsel %vm21, %v20, 0
    %25 = vmatpush.msra.mxu0 0.0
    %26 = vmatpush.msra.mxu0 0.0
    %27 = vmatpush.msra.mxu0 0.0
    %28 = vmatpush.msra.mxu0 0.0
    %29 = vmatpush.msra.mxu0 0.0
    %30 = vmatpush.msra.mxu0 0.0
    %31 = vmatpush.msra.mxu0 0.0
    %32 = vmatpush.msra.mxu0 0.0
    %33 = vmatpush.msra.mxu0 0.0
    %34 = vmatpush.msra.mxu0 0.0
    %35 = vmatpush.msra.mxu0 0.0
    %36 = vmatpush.msra.mxu0 0.0
    %37 = vmatpush.msra.mxu0 0.0
    %38 = vmatpush.msra.mxu0 0.0
    %39 = vmatpush.msra.mxu0 0.0
    %40 = vmatpush.msra.mxu0 %v19
    %41 = vmatmul.f32.gmra.mxu0 %v23
    %v42 = vpop.f32.mrf.mxu0
    %v43 = vadd.f32 0.0, %v42
    %44 = vdwg.mxu0
    %v45 = vmul.f32 %v43, %v43
    %vm46 = vcmask 286720
    %v47 = vsel %vm46, %v45, 0.0
    %48 = vadd.xlane.f32.xlu0 %v47
    %v49 = vpop.xlane.xlu0 %48
    %v50 = vrsqrt.pop %v49
    %v51 = vmul.f32 %v50, %v49
    %v52 = vmul.f32 %v51, %v50
    %v53 = vmul.f32 0.5, %v52
    %v54 = vsub.f32 1.5, %v53
    %v55 = vmul.f32 %v50, %v54
    %v56 = vmul.f32 %v49, %v55
    %vm57 = vcmp.eq.f32.partialorder %v49, inf
    %v58 = vsel %vm57, %v49, %v56
    %vm59 = vcmp.eq.f32.partialorder %v49, 0.0
    %v60 = vand.u32 %v49, 2147483648
    %v61 = vsel %vm59, %v60, %v58
    %v62 = vadd.f32 %v61, 1e-12
    %v63 = vrcp.pop %v62
    %v64 = vmul.f32 %v62, %v63
    %v65 = vsub.f32 1.0, %v64
    %v66 = vmul.f32 %v63, %v65
    %v67 = vadd.f32 %v63, %v66
    %vm68 = vweird.f32 %v62
    %vm69 = vweird.f32 %v63
    %vm70 = vmor %vm68, %vm69
    %v71 = vsel %vm70, %v63, %v67
    %v72 = vand.u32 2147483647, %v62
    %vm73 = vcmp.eq.f32.partialorder %v72, 8.507059e+37
    %v74 = vand.u32 %v62, 2147483648
    %v75 = vor.u32 1.1754944e-38, %v74
    %v76 = vsel %vm73, %v75, %v71
    %v77 = vmul.f32 1.0, %v76
    %v78 = vmul.f32 %v43, %v77
    %vm79 = vcmask 293888
    %v81 = vsel %vm79, %v78, 0
    %v84 = vsel %vm79, %v19, 0
    %86 = vmatpush.xpose.msra.mxu0 0.0
    %87 = vmatpush.xpose.msra.mxu0 0.0
    %88 = vmatpush.xpose.msra.mxu0 0.0
    %89 = vmatpush.xpose.msra.mxu0 0.0
    %90 = vmatpush.xpose.msra.mxu0 0.0
    %91 = vmatpush.xpose.msra.mxu0 0.0
    %92 = vmatpush.xpose.msra.mxu0 0.0
    %93 = vmatpush.xpose.msra.mxu0 0.0
    %94 = vmatpush.xpose.msra.mxu0 0.0
    %95 = vmatpush.xpose.msra.mxu0 0.0
    %96 = vmatpush.xpose.msra.mxu0 0.0
    %97 = vmatpush.xpose.msra.mxu0 0.0
    %98 = vmatpush.xpose.msra.mxu0 0.0
    %99 = vmatpush.xpose.msra.mxu0 0.0
    %100 = vmatpush.xpose.msra.mxu0 0.0
    %101 = vmatpush.xpose.msra.mxu0 %v84
    %102 = vmatmul.f32.gmra.mxu0 %v81
    %v103 = vpop.f32.mrf.mxu0
    %v104 = vadd.f32 0.0, %v103
    %105 = vdwg.mxu0
    %v106 = vmul.f32 %v104, %v104
    %vm107 = vcmask 57344
    %v108 = vsel %vm107, %v106, 0.0
    %109 = vadd.xlane.f32.xlu0 %v108
    %v110 = vpop.xlane.xlu0 %109
    %v111 = vrsqrt.pop %v110
    %v112 = vmul.f32 %v111, %v110
    %v113 = vmul.f32 %v112, %v111
    %v114 = vmul.f32 0.5, %v113
    %v115 = vsub.f32 1.5, %v114
    %v116 = vmul.f32 %v111, %v115
    %v117 = vmul.f32 %v110, %v116
    %vm118 = vcmp.eq.f32.partialorder %v110, inf
    %v119 = vsel %vm118, %v110, %v117
    %vm120 = vcmp.eq.f32.partialorder %v110, 0.0
    %v121 = vand.u32 %v110, 2147483648
    %v122 = vsel %vm120, %v121, %v119
    %v123 = vadd.f32 %v122, 1e-12
    %v124 = vrcp.pop %v123
    %v125 = vmul.f32 %v123, %v124
    %v126 = vsub.f32 1.0, %v125
    %v127 = vmul.f32 %v124, %v126
    %v128 = vadd.f32 %v124, %v127
    %vm129 = vweird.f32 %v123
    %vm130 = vweird.f32 %v124
    %vm131 = vmor %vm129, %vm130
    %v132 = vsel %vm131, %v124, %v128
    %v133 = vand.u32 2147483647, %v123
    %vm134 = vcmp.eq.f32.partialorder %v133, 8.507059e+37
    %v135 = vand.u32 %v123, 2147483648
    %v136 = vor.u32 1.1754944e-38, %v135
    %v137 = vsel %vm134, %v136, %v132
    %v138 = vmul.f32 1.0, %v137
    %v139 = vmul.f32 %v104, %v138
    %v140 = vmul.f32 %v122, %v122
    %v141 = vrcp.pop %v140
    %v142 = vmul.f32 %v140, %v141
    %v143 = vsub.f32 1.0, %v142
    %v144 = vmul.f32 %v141, %v143
    %v145 = vadd.f32 %v141, %v144
    %vm146 = vweird.f32 %v140
    %vm147 = vweird.f32 %v141
    %vm148 = vmor %vm146, %vm147
    %v149 = vsel %vm148, %v141, %v145
    %v150 = vand.u32 2147483647, %v140
    %vm151 = vcmp.eq.f32.partialorder %v150, 8.507059e+37
    %v152 = vand.u32 %v140, 2147483648
    %v153 = vor.u32 1.1754944e-38, %v152
    %v154 = vsel %vm151, %v153, %v149
    %v155 = vmul.f32 %v123, %v154
    %vm156 = vcmask 0
    %157 = vst.msk [vmem:[#allocation2] sm:$0x1] %vm156, %v155
    %158 = vst.msk [vmem:[#allocation4] sm:$0x1] %vm107, %v139
    %159 = vst.msk [vmem:[#allocation6] sm:$0x1] %vm46, %v78
    // Predicated region
    $region14: #{spectral_norm_conv_forward.2} parent=1 // pred_check
      _
    $region15: #{spectral_norm_conv_forward.2} parent=1 // pred_check_branch
      %161 = sbr.rel (0) target = $region17
    $region16: #{spectral_norm_conv_forward.2} parent=1 // pred_region
      %163 = vsyncadd [#allocation3], 0
      %s165 = sshll.u32 [#allocation2], 4
      %s166 = int_to_ptr.vmem [resolvable:$true] %s165
      %s167 = sshll.u32 %s3, 4
      %s168 = int_to_ptr.hbm [resolvable:$true] %s167
      %170 = dma.vmem_to_hbm [thread:$0]  %s166, 16, %s168, [#allocation3]
    $region17: #{spectral_norm_conv_forward.2} parent=1 // pred_fallthru
      _
    // Predicated region
    $region18: #{spectral_norm_conv_forward.2} parent=1 // pred_check
      _
    $region19: #{spectral_norm_conv_forward.2} parent=1 // pred_check_branch
      %172 = sbr.rel (0) target = $region21
    $region20: #{spectral_norm_conv_forward.2} parent=1 // pred_region
      %174 = vsyncadd [#allocation5], 0
      %s176 = sshll.u32 [#allocation4], 4
      %s177 = int_to_ptr.vmem [resolvable:$true] %s176
      %s178 = sshll.u32 %s4, 4
      %s179 = int_to_ptr.hbm [resolvable:$true] %s178
      %181 = dma.vmem_to_hbm [thread:$0]  %s177, 16, %s179, [#allocation5]
    $region21: #{spectral_norm_conv_forward.2} parent=1 // pred_fallthru
      _
    // Predicated region
    $region22: #{spectral_norm_conv_forward.2} parent=1 // pred_check
      _
    $region23: #{spectral_norm_conv_forward.2} parent=1 // pred_check_branch
      %183 = sbr.rel (0) target = $region25
    $region24: #{spectral_norm_conv_forward.2} parent=1 // pred_region
      %185 = vsyncadd [#allocation5], 0
      %s187 = sshll.u32 [#allocation6], 4
      %s188 = int_to_ptr.vmem [resolvable:$true] %s187
      %s189 = sshll.u32 %s5, 4
      %s190 = int_to_ptr.hbm [resolvable:$true] %s189
      %192 = dma.vmem_to_hbm [thread:$0]  %s188, 16, %s190, [#allocation5]
    $region25: #{spectral_norm_conv_forward.2} parent=1 // pred_fallthru
      _
    // Predicated region
    $region26: #{spectral_norm_conv_forward.2} parent=1 // pred_check
      _
    $region27: #{spectral_norm_conv_forward.2} parent=1 // pred_check_branch
      %194 = sbr.rel (0) target = $region29
    $region28: #{spectral_norm_conv_forward.2} parent=1 // pred_region
      %196 = dma.done [#allocation3], 16
    $region29: #{spectral_norm_conv_forward.2} parent=1 // pred_fallthru
      _
    // Predicated region
    $region30: #{spectral_norm_conv_forward.2} parent=1 // pred_check
      _
    $region31: #{spectral_norm_conv_forward.2} parent=1 // pred_check_branch
      %198 = sbr.rel (0) target = $region33
    $region32: #{spectral_norm_conv_forward.2} parent=1 // pred_region
      %200 = dma.done [#allocation5], 16
    $region33: #{spectral_norm_conv_forward.2} parent=1 // pred_fallthru
      _
    // Predicated region
    $region34: #{spectral_norm_conv_forward.2} parent=1 // pred_check
      _
    $region35: #{spectral_norm_conv_forward.2} parent=1 // pred_check_branch
      %202 = sbr.rel (0) target = $region37
    $region36: #{spectral_norm_conv_forward.2} parent=1 // pred_region
      %204 = dma.done [#allocation5], 16
    $region37: #{spectral_norm_conv_forward.2} parent=1 // pred_fallthru
      _
    %205 = vsyncpa [#allocation3], 1
    %206 = vsyncpa [#allocation5], 1

</llo_original>
